<compile_context>
chip_gen: v5e
topology: v5e:2x2
jax: 0.10.0
libtpu: 0.0.40
codegen_flags: <defaults>
</compile_context>

<pallas_src>
import functools
import numpy as np
import jax
import jax.numpy as jnp
from jax.experimental import pallas as pl
from jax.experimental.pallas import tpu as pltpu


def _lstm_chunk_kernel(nt_ref, xw_ref, whh_ref, out_ref, h_ref, c_ref, *,
                       chunk, out_size, b_shard, matmul_dtype):
    """One grid step = one batch shard x `chunk` timesteps.

    xw_ref : (b_shard, chunk*4O)  precomputed x@Wx + fused bias, lane-dense, gate order (i,f,o,g)
    whh_ref: (O, 4O)              recurrent weights, gate order (i,f,o,g)
    out_ref: (b_shard, chunk*O)   lane-dense output block
    h_ref/c_ref: (b_shard, O)     VMEM-carried recurrent state (persists across chunks)
    """
    shard = pl.program_id(0)
    ci = pl.program_id(1)

    @pl.when(ci == 0)
    def _():
        h_ref[...] = jnp.zeros_like(h_ref)
        c_ref[...] = jnp.zeros_like(c_ref)

    O = out_size
    G = 4 * O
    # Loop invariants hoisted out of the unrolled time loop.
    whh = whh_ref[...].astype(matmul_dtype)                                # (O, 4O)
    row_ids = (jax.lax.broadcasted_iota(jnp.int32, (b_shard, O), 0)
               + shard * b_shard)                                          # global batch rows

    h = h_ref[...]
    c = c_ref[...]
    ys = []
    for i in range(chunk):                                                 # static unroll
        # Recurrent critical path: ONE matmul + ONE add (input projection precomputed).
        gates = (xw_ref[:, i * G:(i + 1) * G]
                 + jnp.dot(h.astype(matmul_dtype), whh,
                           preferred_element_type=jnp.float32))            # (b_shard, 4O)
        # Gate order (i, f, o, g): one contiguous sigmoid slab, one tanh slab.
        sig = jax.nn.sigmoid(gates[:, :3 * O])
        gg = jnp.tanh(gates[:, 3 * O:])
        ig = sig[:, 0 * O:1 * O]
        fg = sig[:, 1 * O:2 * O]
        og = sig[:, 2 * O:3 * O]
        c_new = fg * c + ig * gg
        h_new = og * jnp.tanh(c_new)

        # packed-sequence semantics: rows with t >= length keep their state and emit 0.
        n_active = nt_ref[ci * chunk + i]                                  # SMEM scalar read
        mask = row_ids < n_active                                          # (b_shard, O)
        h = jnp.where(mask, h_new, h)
        c = jnp.where(mask, c_new, c)
        ys.append(jnp.where(mask, jnp.tanh(h_new), 0.0).astype(out_ref.dtype))

    # Single full-lane store per chunk instead of `chunk` sub-128-lane masked stores.
    out_ref[...] = jnp.concatenate(ys, axis=1)
    h_ref[...] = h
    c_ref[...] = c


def lstm_forward(x, lengths_np, params, *, chunk=8, matmul_dtype=jnp.float32):
    """x: (T, B, I) f32; lengths_np: host numpy int array (B,), sorted descending."""
    T, B, I = x.shape
    O = params["whh"].shape[0]
    lengths_np = np.asarray(lengths_np)
    assert np.all(np.diff(lengths_np) <= 0), \
        "lengths must be sorted descending (pack_padded_sequence enforce_sorted=True semantics)"
    t_out = int(lengths_np.max())                    # pad_packed_sequence returns max(lengths)

    n_chunks = -(-t_out // chunk)
    t_pad = n_chunks * chunk
    b_pad = -(-B // 8) * 8
    n_shards = 2 if (b_pad >= 16 and b_pad % 16 == 0) else 1   # v7x second TC when batch allows
    b_shard = b_pad // n_shards
    if n_chunks > 1:
        assert (chunk * O) % 128 == 0, "chunk * output_size must be a multiple of 128 lanes"

    # Fold the Linear layer + all biases into the gate projection (exact) and permute the
    # gate columns (i,f,g,o) -> (i,f,o,g).
    perm = np.concatenate([np.arange(0, 2 * O), np.arange(3 * O, 4 * O), np.arange(2 * O, 3 * O)])
    wx = (params["wl"] @ params["wih"])[:, perm]                                     # (I, 4O)
    b0 = (params["bl"] @ params["wih"] + params["bih"] + params["bhh"])[:, perm]     # (1, 4O)
    whh = params["whh"][:, perm].astype(matmul_dtype)                                # (O, 4O)

    # Precompute the input projection off the recurrent chain; pad T to a chunk multiple and
    # B to the 8-sublane minimum; lay out lane-dense as (B_pad, T_pad*4O).
    t_copy = min(T, t_pad)
    xw = jnp.einsum('tbi,ij->tbj', x[:t_copy].astype(jnp.float32), wx) + b0          # (t_copy,B,4O)
    xw_pad = jnp.zeros((t_pad, b_pad, 4 * O), jnp.float32).at[:t_copy, :B, :].set(xw)
    xw_lane = xw_pad.transpose(1, 0, 2).reshape(b_pad, t_pad * 4 * O)

    # Per-timestep active-row counts (lengths sorted descending) -> SMEM via scalar prefetch.
    nt = jnp.asarray(
        (lengths_np[None, :] > np.arange(t_pad)[:, None]).sum(axis=1).astype(np.int32))

    kernel = functools.partial(_lstm_chunk_kernel, chunk=chunk, out_size=O,
                               b_shard=b_shard, matmul_dtype=matmul_dtype)

    # Explicit VMEM budget: xw/out blocks double-buffered, Whh single-buffered, h/c scratch.
    itemsize = jnp.dtype(matmul_dtype).itemsize
    need = (2 * b_shard * chunk * 4 * O * 4
            + 2 * b_shard * chunk * O * 4
            + O * 4 * O * itemsize
            + 2 * b_shard * O * 4)
    vmem_limit = int(min(64 << 20, max(16 << 20, 2 * need)))

    out = pl.pallas_call(
        kernel,
        out_shape=jax.ShapeDtypeStruct((b_pad, t_pad * O), jnp.float32),
        grid_spec=pltpu.PrefetchScalarGridSpec(
            num_scalar_prefetch=1,                    # nt -> SMEM
            grid=(n_shards, n_chunks),
            in_specs=[
                pl.BlockSpec((b_shard, chunk * 4 * O), lambda s, ci, nt: (s, ci)),  # xW slab
                pl.BlockSpec((O, 4 * O), lambda s, ci, nt: (0, 0),
                             pipeline_mode=pl.Buffered(1)),                          # Whh (const)
            ],
            out_specs=pl.BlockSpec((b_shard, chunk * O), lambda s, ci, nt: (s, ci)),
            scratch_shapes=[
                pltpu.VMEM((b_shard, O), jnp.float32),   # h
                pltpu.VMEM((b_shard, O), jnp.float32),   # c
            ],
        ),
        compiler_params=pltpu.CompilerParams(
            dimension_semantics=("parallel", "arbitrary"),   # batch shards parallel, time serial
            vmem_limit_bytes=vmem_limit),
    )(nt, xw_lane, whh)

    # (B_pad, T_pad*O) -> (T_out, B, O), matching pad_packed_sequence layout.
    return out.reshape(b_pad, t_pad, O).transpose(1, 0, 2)[:t_out, :B, :]


def init_params(key, input_size, hidden_size, output_size):
    """Deterministic init mimicking PyTorch's uniform ranges. Weights stored pre-transposed."""
    k = jax.random.split(key, 6)
    bl_lin = 1.0 / np.sqrt(input_size)
    bl_rnn = 1.0 / np.sqrt(output_size)
    u = lambda kk, shape, b: jax.random.uniform(kk, shape, jnp.float32, -b, b)
    return {
        "wl":  u(k[0], (input_size, hidden_size), bl_lin),       # Linear weight^T
        "bl":  u(k[1], (1, hidden_size), bl_lin),
        "wih": u(k[2], (hidden_size, 4 * output_size), bl_rnn),  # weight_ih_l0^T
        "whh": u(k[3], (output_size, 4 * output_size), bl_rnn),  # weight_hh_l0^T
        "bih": u(k[4], (1, 4 * output_size), bl_rnn),
        "bhh": u(k[5], (1, 4 * output_size), bl_rnn),
    }


def lstm_forward_ref(x, lengths_np, params):
    """Pure-JAX reference (un-folded math, original PyTorch gate order)."""
    T, B, I = x.shape
    O = params["whh"].shape[0]
    t_out = int(np.max(lengths_np))
    lengths = jnp.asarray(lengths_np, dtype=jnp.int32)
    proj = x @ params["wl"] + params["bl"]                       # (T, B, H)

    def step(carry, inp):
        h, c = carry
        xt, t = inp
        gates = xt @ params["wih"] + params["bih"] + h @ params["whh"] + params["bhh"]
        i, f, g, o = jnp.split(gates, 4, axis=-1)
        i, f, g, o = jax.nn.sigmoid(i), jax.nn.sigmoid(f), jnp.tanh(g), jax.nn.sigmoid(o)
        c_new = f * c + i * g
        h_new = o * jnp.tanh(c_new)
        mask = (lengths > t)[:, None]
        h = jnp.where(mask, h_new, h)
        c = jnp.where(mask, c_new, c)
        out = jnp.where(mask, jnp.tanh(h_new), 0.0)
        return (h, c), out

    init = (jnp.zeros((B, O), jnp.float32), jnp.zeros((B, O), jnp.float32))
    _, ys = jax.lax.scan(step, init, (proj[:t_out], jnp.arange(t_out)))
    return ys


if __name__ == "__main__":
    T, B = 12, 4
    input_size, hidden_size, output_size = 16, 32, 32

    key = jax.random.PRNGKey(0)
    kx, kp = jax.random.split(key)
    x = jax.random.normal(kx, (T, B, input_size), dtype=jnp.float32)
    lengths = np.array([12, 10, 7, 3], dtype=np.int32)   # sorted descending (pack_padded_sequence)

    params = init_params(kp, input_size, hidden_size, output_size)

    out = jax.block_until_ready(lstm_forward(x, lengths, params, chunk=8))
    ref = jax.block_until_ready(lstm_forward_ref(x, lengths, params))
    # slightly looser tolerance: folding the Linear/input projection re-associates f32 sums
    np.testing.assert_allclose(np.asarray(out), np.asarray(ref), rtol=1e-4, atol=1e-5)

    print("KERNEL_OK")
</pallas_src>

<mosaic_0001>
module attributes {stable_mosaic.version = 11 : i64} {
  func.func @_lstm_chunk_kernel(%arg0: i32, %arg1: i32, %arg2: memref<16xi32, #tpu.memory_space<smem>>, %arg3: memref<8x1024xf32, #tpu.memory_space<vmem>>, %arg4: memref<32x128xf32, #tpu.memory_space<vmem>>, %arg5: memref<8x256xf32, #tpu.memory_space<vmem>>, %arg6: memref<8x32xf32, #tpu.memory_space<vmem>>, %arg7: memref<8x32xf32, #tpu.memory_space<vmem>>) attributes {dimension_semantics = [#tpu.dimension_semantics<parallel>, #tpu.dimension_semantics<arbitrary>], iteration_bounds = array<i64: 1, 2>, scalar_prefetch = 1 : i64, scratch_operands = 2 : i64, tpu.core_type = #tpu.core_type<tc>, window_params = [{transform_indices = @transform_0, window_bounds = array<i64: 8, 1024>}, {pipeline_mode = #tpu.pipeline_mode<synchronous>, transform_indices = @transform_1, window_bounds = array<i64: 32, 128>}, {transform_indices = @transform_2, window_bounds = array<i64: 8, 256>}]} {
    %c0_i32 = arith.constant 0 : i32
    %0 = arith.cmpi eq, %arg1, %c0_i32 : i32
    %1 = arith.extui %0 : i1 to i32
    %c0_i32_0 = arith.constant 0 : i32
    %2 = arith.cmpi ne, %1, %c0_i32_0 : i32
    scf.if %2 {
      %cst_53 = arith.constant 0.000000e+00 : f32
      %254 = vector.broadcast %cst_53 : f32 to vector<8x32xf32>
      %c0_54 = arith.constant 0 : index
      %c0_55 = arith.constant 0 : index
      %255 = vector.load %arg6[%c0_54, %c0_55] : memref<8x32xf32, #tpu.memory_space<vmem>>, vector<8x32xf32>
      tpu.vector_store %arg6[%c0_54, %c0_55], %254 {strides = array<i32>} : memref<8x32xf32, #tpu.memory_space<vmem>>, vector<8x32xf32>,
      %cst_56 = arith.constant 0.000000e+00 : f32
      %256 = vector.broadcast %cst_56 : f32 to vector<8x32xf32>
      %c0_57 = arith.constant 0 : index
      %c0_58 = arith.constant 0 : index
      %257 = vector.load %arg7[%c0_57, %c0_58] : memref<8x32xf32, #tpu.memory_space<vmem>>, vector<8x32xf32>
      tpu.vector_store %arg7[%c0_57, %c0_58], %256 {strides = array<i32>} : memref<8x32xf32, #tpu.memory_space<vmem>>, vector<8x32xf32>,
    } else {
    }
    %c0 = arith.constant 0 : index
    %c0_1 = arith.constant 0 : index
    %3 = vector.load %arg4[%c0, %c0_1] : memref<32x128xf32, #tpu.memory_space<vmem>>, vector<32x128xf32>
    %4 = tpu.iota {dimensions = array<i32: 0>} : vector<8x32xi32>
    %c8_i32 = arith.constant 8 : i32
    %5 = arith.muli %arg0, %c8_i32 : i32
    %6 = vector.broadcast %5 : i32 to vector<8x32xi32>
    %7 = arith.addi %4, %6 : vector<8x32xi32>
    %c0_2 = arith.constant 0 : index
    %c0_3 = arith.constant 0 : index
    %8 = vector.load %arg6[%c0_2, %c0_3] : memref<8x32xf32, #tpu.memory_space<vmem>>, vector<8x32xf32>
    %c0_4 = arith.constant 0 : index
    %c0_5 = arith.constant 0 : index
    %9 = vector.load %arg7[%c0_4, %c0_5] : memref<8x32xf32, #tpu.memory_space<vmem>>, vector<8x32xf32>
    %c0_6 = arith.constant 0 : index
    %c0_7 = arith.constant 0 : index
    %10 = vector.load %arg3[%c0_6, %c0_7] : memref<8x1024xf32, #tpu.memory_space<vmem>>, vector<8x128xf32>
    %cst = arith.constant dense<0.000000e+00> : vector<8x128xf32>
    %11 = tpu.matmul %8, %3, %cst {dimension_numbers = #tpu.dot_dimension_numbers<[1], [0], [0], [1], [0, 0, 1, 1], [], []>} : vector<8x32xf32>, vector<32x128xf32>, vector<8x128xf32> -> vector<8x128xf32>
    %12 = arith.addf %10, %11 : vector<8x128xf32>
    %13 = vector.extract_strided_slice %12 {offsets = [0, 0], sizes = [8, 96], strides = [1, 1]} : vector<8x128xf32> to vector<8x96xf32>
    %14 = arith.negf %13 : vector<8x96xf32>
    %15 = math.exp %14 : vector<8x96xf32>
    %cst_8 = arith.constant 1.000000e+00 : f32
    %16 = vector.broadcast %cst_8 : f32 to vector<8x96xf32>
    %17 = arith.addf %16, %15 : vector<8x96xf32>
    %18 = arith.divf %16, %17 : vector<8x96xf32>
    %19 = vector.extract_strided_slice %12 {offsets = [0, 96], sizes = [8, 32], strides = [1, 1]} : vector<8x128xf32> to vector<8x32xf32>
    %20 = math.tanh %19 : vector<8x32xf32>
    %21 = vector.extract_strided_slice %18 {offsets = [0, 0], sizes = [8, 32], strides = [1, 1]} : vector<8x96xf32> to vector<8x32xf32>
    %22 = vector.extract_strided_slice %18 {offsets = [0, 32], sizes = [8, 32], strides = [1, 1]} : vector<8x96xf32> to vector<8x32xf32>
    %23 = vector.extract_strided_slice %18 {offsets = [0, 64], sizes = [8, 32], strides = [1, 1]} : vector<8x96xf32> to vector<8x32xf32>
    %24 = arith.mulf %22, %9 : vector<8x32xf32>
    %25 = arith.mulf %21, %20 : vector<8x32xf32>
    %26 = arith.addf %24, %25 : vector<8x32xf32>
    %27 = math.tanh %26 : vector<8x32xf32>
    %28 = arith.mulf %23, %27 : vector<8x32xf32>
    %c8_i32_9 = arith.constant 8 : i32
    %29 = arith.muli %arg1, %c8_i32_9 : i32
    %c0_i32_10 = arith.constant 0 : i32
    %30 = arith.addi %29, %c0_i32_10 : i32
    %31 = arith.index_cast %30 : i32 to index
    %32 = memref.load %arg2[%31] : memref<16xi32, #tpu.memory_space<smem>>
    %33 = vector.broadcast %32 : i32 to vector<8x32xi32>
    %34 = arith.cmpi slt, %7, %33 : vector<8x32xi32>
    %35 = arith.select %34, %28, %8 : vector<8x32xi1>, vector<8x32xf32>
    %36 = arith.select %34, %26, %9 : vector<8x32xi1>, vector<8x32xf32>
    %37 = math.tanh %28 : vector<8x32xf32>
    %cst_11 = arith.constant 0.000000e+00 : f32
    %38 = vector.broadcast %cst_11 : f32 to vector<8x32xf32>
    %39 = arith.select %34, %37, %38 : vector<8x32xi1>, vector<8x32xf32>
    %c0_12 = arith.constant 0 : index
    %c128 = arith.constant 128 : index
    %40 = vector.load %arg3[%c0_12, %c128] : memref<8x1024xf32, #tpu.memory_space<vmem>>, vector<8x128xf32>
    %cst_13 = arith.constant dense<0.000000e+00> : vector<8x128xf32>
    %41 = tpu.matmul %35, %3, %cst_13 {dimension_numbers = #tpu.dot_dimension_numbers<[1], [0], [0], [1], [0, 0, 1, 1], [], []>} : vector<8x32xf32>, vector<32x128xf32>, vector<8x128xf32> -> vector<8x128xf32>
    %42 = arith.addf %40, %41 : vector<8x128xf32>
    %43 = vector.extract_strided_slice %42 {offsets = [0, 0], sizes = [8, 96], strides = [1, 1]} : vector<8x128xf32> to vector<8x96xf32>
    %44 = arith.negf %43 : vector<8x96xf32>
    %45 = math.exp %44 : vector<8x96xf32>
    %cst_14 = arith.constant 1.000000e+00 : f32
    %46 = vector.broadcast %cst_14 : f32 to vector<8x96xf32>
    %47 = arith.addf %46, %45 : vector<8x96xf32>
    %48 = arith.divf %46, %47 : vector<8x96xf32>
    %49 = vector.extract_strided_slice %42 {offsets = [0, 96], sizes = [8, 32], strides = [1, 1]} : vector<8x128xf32> to vector<8x32xf32>
    %50 = math.tanh %49 : vector<8x32xf32>
    %51 = vector.extract_strided_slice %48 {offsets = [0, 0], sizes = [8, 32], strides = [1, 1]} : vector<8x96xf32> to vector<8x32xf32>
    %52 = vector.extract_strided_slice %48 {offsets = [0, 32], sizes = [8, 32], strides = [1, 1]} : vector<8x96xf32> to vector<8x32xf32>
    %53 = vector.extract_strided_slice %48 {offsets = [0, 64], sizes = [8, 32], strides = [1, 1]} : vector<8x96xf32> to vector<8x32xf32>
    %54 = arith.mulf %52, %36 : vector<8x32xf32>
    %55 = arith.mulf %51, %50 : vector<8x32xf32>
    %56 = arith.addf %54, %55 : vector<8x32xf32>
    %57 = math.tanh %56 : vector<8x32xf32>
    %58 = arith.mulf %53, %57 : vector<8x32xf32>
    %c8_i32_15 = arith.constant 8 : i32
    %59 = arith.muli %arg1, %c8_i32_15 : i32
    %c1_i32 = arith.constant 1 : i32
    %60 = arith.addi %59, %c1_i32 : i32
    %61 = arith.index_cast %60 : i32 to index
    %62 = memref.load %arg2[%61] : memref<16xi32, #tpu.memory_space<smem>>
    %63 = vector.broadcast %62 : i32 to vector<8x32xi32>
    %64 = arith.cmpi slt, %7, %63 : vector<8x32xi32>
    %65 = arith.select %64, %58, %35 : vector<8x32xi1>, vector<8x32xf32>
    %66 = arith.select %64, %56, %36 : vector<8x32xi1>, vector<8x32xf32>
    %67 = math.tanh %58 : vector<8x32xf32>
    %cst_16 = arith.constant 0.000000e+00 : f32
    %68 = vector.broadcast %cst_16 : f32 to vector<8x32xf32>
    %69 = arith.select %64, %67, %68 : vector<8x32xi1>, vector<8x32xf32>
    %c0_17 = arith.constant 0 : index
    %c256 = arith.constant 256 : index
    %70 = vector.load %arg3[%c0_17, %c256] : memref<8x1024xf32, #tpu.memory_space<vmem>>, vector<8x128xf32>
    %cst_18 = arith.constant dense<0.000000e+00> : vector<8x128xf32>
    %71 = tpu.matmul %65, %3, %cst_18 {dimension_numbers = #tpu.dot_dimension_numbers<[1], [0], [0], [1], [0, 0, 1, 1], [], []>} : vector<8x32xf32>, vector<32x128xf32>, vector<8x128xf32> -> vector<8x128xf32>
    %72 = arith.addf %70, %71 : vector<8x128xf32>
    %73 = vector.extract_strided_slice %72 {offsets = [0, 0], sizes = [8, 96], strides = [1, 1]} : vector<8x128xf32> to vector<8x96xf32>
    %74 = arith.negf %73 : vector<8x96xf32>
    %75 = math.exp %74 : vector<8x96xf32>
    %cst_19 = arith.constant 1.000000e+00 : f32
    %76 = vector.broadcast %cst_19 : f32 to vector<8x96xf32>
    %77 = arith.addf %76, %75 : vector<8x96xf32>
    %78 = arith.divf %76, %77 : vector<8x96xf32>
    %79 = vector.extract_strided_slice %72 {offsets = [0, 96], sizes = [8, 32], strides = [1, 1]} : vector<8x128xf32> to vector<8x32xf32>
    %80 = math.tanh %79 : vector<8x32xf32>
    %81 = vector.extract_strided_slice %78 {offsets = [0, 0], sizes = [8, 32], strides = [1, 1]} : vector<8x96xf32> to vector<8x32xf32>
    %82 = vector.extract_strided_slice %78 {offsets = [0, 32], sizes = [8, 32], strides = [1, 1]} : vector<8x96xf32> to vector<8x32xf32>
    %83 = vector.extract_strided_slice %78 {offsets = [0, 64], sizes = [8, 32], strides = [1, 1]} : vector<8x96xf32> to vector<8x32xf32>
    %84 = arith.mulf %82, %66 : vector<8x32xf32>
    %85 = arith.mulf %81, %80 : vector<8x32xf32>
    %86 = arith.addf %84, %85 : vector<8x32xf32>
    %87 = math.tanh %86 : vector<8x32xf32>
    %88 = arith.mulf %83, %87 : vector<8x32xf32>
    %c8_i32_20 = arith.constant 8 : i32
    %89 = arith.muli %arg1, %c8_i32_20 : i32
    %c2_i32 = arith.constant 2 : i32
    %90 = arith.addi %89, %c2_i32 : i32
    %91 = arith.index_cast %90 : i32 to index
    %92 = memref.load %arg2[%91] : memref<16xi32, #tpu.memory_space<smem>>
    %93 = vector.broadcast %92 : i32 to vector<8x32xi32>
    %94 = arith.cmpi slt, %7, %93 : vector<8x32xi32>
    %95 = arith.select %94, %88, %65 : vector<8x32xi1>, vector<8x32xf32>
    %96 = arith.select %94, %86, %66 : vector<8x32xi1>, vector<8x32xf32>
    %97 = math.tanh %88 : vector<8x32xf32>
    %cst_21 = arith.constant 0.000000e+00 : f32
    %98 = vector.broadcast %cst_21 : f32 to vector<8x32xf32>
    %99 = arith.select %94, %97, %98 : vector<8x32xi1>, vector<8x32xf32>
    %c0_22 = arith.constant 0 : index
    %c384 = arith.constant 384 : index
    %100 = vector.load %arg3[%c0_22, %c384] : memref<8x1024xf32, #tpu.memory_space<vmem>>, vector<8x128xf32>
    %cst_23 = arith.constant dense<0.000000e+00> : vector<8x128xf32>
    %101 = tpu.matmul %95, %3, %cst_23 {dimension_numbers = #tpu.dot_dimension_numbers<[1], [0], [0], [1], [0, 0, 1, 1], [], []>} : vector<8x32xf32>, vector<32x128xf32>, vector<8x128xf32> -> vector<8x128xf32>
    %102 = arith.addf %100, %101 : vector<8x128xf32>
    %103 = vector.extract_strided_slice %102 {offsets = [0, 0], sizes = [8, 96], strides = [1, 1]} : vector<8x128xf32> to vector<8x96xf32>
    %104 = arith.negf %103 : vector<8x96xf32>
    %105 = math.exp %104 : vector<8x96xf32>
    %cst_24 = arith.constant 1.000000e+00 : f32
    %106 = vector.broadcast %cst_24 : f32 to vector<8x96xf32>
    %107 = arith.addf %106, %105 : vector<8x96xf32>
    %108 = arith.divf %106, %107 : vector<8x96xf32>
    %109 = vector.extract_strided_slice %102 {offsets = [0, 96], sizes = [8, 32], strides = [1, 1]} : vector<8x128xf32> to vector<8x32xf32>
    %110 = math.tanh %109 : vector<8x32xf32>
    %111 = vector.extract_strided_slice %108 {offsets = [0, 0], sizes = [8, 32], strides = [1, 1]} : vector<8x96xf32> to vector<8x32xf32>
    %112 = vector.extract_strided_slice %108 {offsets = [0, 32], sizes = [8, 32], strides = [1, 1]} : vector<8x96xf32> to vector<8x32xf32>
    %113 = vector.extract_strided_slice %108 {offsets = [0, 64], sizes = [8, 32], strides = [1, 1]} : vector<8x96xf32> to vector<8x32xf32>
    %114 = arith.mulf %112, %96 : vector<8x32xf32>
    %115 = arith.mulf %111, %110 : vector<8x32xf32>
    %116 = arith.addf %114, %115 : vector<8x32xf32>
    %117 = math.tanh %116 : vector<8x32xf32>
    %118 = arith.mulf %113, %117 : vector<8x32xf32>
    %c8_i32_25 = arith.constant 8 : i32
    %119 = arith.muli %arg1, %c8_i32_25 : i32
    %c3_i32 = arith.constant 3 : i32
    %120 = arith.addi %119, %c3_i32 : i32
    %121 = arith.index_cast %120 : i32 to index
    %122 = memref.load %arg2[%121] : memref<16xi32, #tpu.memory_space<smem>>
    %123 = vector.broadcast %122 : i32 to vector<8x32xi32>
    %124 = arith.cmpi slt, %7, %123 : vector<8x32xi32>
    %125 = arith.select %124, %118, %95 : vector<8x32xi1>, vector<8x32xf32>
    %126 = arith.select %124, %116, %96 : vector<8x32xi1>, vector<8x32xf32>
    %127 = math.tanh %118 : vector<8x32xf32>
    %cst_26 = arith.constant 0.000000e+00 : f32
    %128 = vector.broadcast %cst_26 : f32 to vector<8x32xf32>
    %129 = arith.select %124, %127, %128 : vector<8x32xi1>, vector<8x32xf32>
    %c0_27 = arith.constant 0 : index
    %c512 = arith.constant 512 : index
    %130 = vector.load %arg3[%c0_27, %c512] : memref<8x1024xf32, #tpu.memory_space<vmem>>, vector<8x128xf32>
    %cst_28 = arith.constant dense<0.000000e+00> : vector<8x128xf32>
    %131 = tpu.matmul %125, %3, %cst_28 {dimension_numbers = #tpu.dot_dimension_numbers<[1], [0], [0], [1], [0, 0, 1, 1], [], []>} : vector<8x32xf32>, vector<32x128xf32>, vector<8x128xf32> -> vector<8x128xf32>
    %132 = arith.addf %130, %131 : vector<8x128xf32>
    %133 = vector.extract_strided_slice %132 {offsets = [0, 0], sizes = [8, 96], strides = [1, 1]} : vector<8x128xf32> to vector<8x96xf32>
    %134 = arith.negf %133 : vector<8x96xf32>
    %135 = math.exp %134 : vector<8x96xf32>
    %cst_29 = arith.constant 1.000000e+00 : f32
    %136 = vector.broadcast %cst_29 : f32 to vector<8x96xf32>
    %137 = arith.addf %136, %135 : vector<8x96xf32>
    %138 = arith.divf %136, %137 : vector<8x96xf32>
    %139 = vector.extract_strided_slice %132 {offsets = [0, 96], sizes = [8, 32], strides = [1, 1]} : vector<8x128xf32> to vector<8x32xf32>
    %140 = math.tanh %139 : vector<8x32xf32>
    %141 = vector.extract_strided_slice %138 {offsets = [0, 0], sizes = [8, 32], strides = [1, 1]} : vector<8x96xf32> to vector<8x32xf32>
    %142 = vector.extract_strided_slice %138 {offsets = [0, 32], sizes = [8, 32], strides = [1, 1]} : vector<8x96xf32> to vector<8x32xf32>
    %143 = vector.extract_strided_slice %138 {offsets = [0, 64], sizes = [8, 32], strides = [1, 1]} : vector<8x96xf32> to vector<8x32xf32>
    %144 = arith.mulf %142, %126 : vector<8x32xf32>
    %145 = arith.mulf %141, %140 : vector<8x32xf32>
    %146 = arith.addf %144, %145 : vector<8x32xf32>
    %147 = math.tanh %146 : vector<8x32xf32>
    %148 = arith.mulf %143, %147 : vector<8x32xf32>
    %c8_i32_30 = arith.constant 8 : i32
    %149 = arith.muli %arg1, %c8_i32_30 : i32
    %c4_i32 = arith.constant 4 : i32
    %150 = arith.addi %149, %c4_i32 : i32
    %151 = arith.index_cast %150 : i32 to index
    %152 = memref.load %arg2[%151] : memref<16xi32, #tpu.memory_space<smem>>
    %153 = vector.broadcast %152 : i32 to vector<8x32xi32>
    %154 = arith.cmpi slt, %7, %153 : vector<8x32xi32>
    %155 = arith.select %154, %148, %125 : vector<8x32xi1>, vector<8x32xf32>
    %156 = arith.select %154, %146, %126 : vector<8x32xi1>, vector<8x32xf32>
    %157 = math.tanh %148 : vector<8x32xf32>
    %cst_31 = arith.constant 0.000000e+00 : f32
    %158 = vector.broadcast %cst_31 : f32 to vector<8x32xf32>
    %159 = arith.select %154, %157, %158 : vector<8x32xi1>, vector<8x32xf32>
    %c0_32 = arith.constant 0 : index
    %c640 = arith.constant 640 : index
    %160 = vector.load %arg3[%c0_32, %c640] : memref<8x1024xf32, #tpu.memory_space<vmem>>, vector<8x128xf32>
    %cst_33 = arith.constant dense<0.000000e+00> : vector<8x128xf32>
    %161 = tpu.matmul %155, %3, %cst_33 {dimension_numbers = #tpu.dot_dimension_numbers<[1], [0], [0], [1], [0, 0, 1, 1], [], []>} : vector<8x32xf32>, vector<32x128xf32>, vector<8x128xf32> -> vector<8x128xf32>
    %162 = arith.addf %160, %161 : vector<8x128xf32>
    %163 = vector.extract_strided_slice %162 {offsets = [0, 0], sizes = [8, 96], strides = [1, 1]} : vector<8x128xf32> to vector<8x96xf32>
    %164 = arith.negf %163 : vector<8x96xf32>
    %165 = math.exp %164 : vector<8x96xf32>
    %cst_34 = arith.constant 1.000000e+00 : f32
    %166 = vector.broadcast %cst_34 : f32 to vector<8x96xf32>
    %167 = arith.addf %166, %165 : vector<8x96xf32>
    %168 = arith.divf %166, %167 : vector<8x96xf32>
    %169 = vector.extract_strided_slice %162 {offsets = [0, 96], sizes = [8, 32], strides = [1, 1]} : vector<8x128xf32> to vector<8x32xf32>
    %170 = math.tanh %169 : vector<8x32xf32>
    %171 = vector.extract_strided_slice %168 {offsets = [0, 0], sizes = [8, 32], strides = [1, 1]} : vector<8x96xf32> to vector<8x32xf32>
    %172 = vector.extract_strided_slice %168 {offsets = [0, 32], sizes = [8, 32], strides = [1, 1]} : vector<8x96xf32> to vector<8x32xf32>
    %173 = vector.extract_strided_slice %168 {offsets = [0, 64], sizes = [8, 32], strides = [1, 1]} : vector<8x96xf32> to vector<8x32xf32>
    %174 = arith.mulf %172, %156 : vector<8x32xf32>
    %175 = arith.mulf %171, %170 : vector<8x32xf32>
    %176 = arith.addf %174, %175 : vector<8x32xf32>
    %177 = math.tanh %176 : vector<8x32xf32>
    %178 = arith.mulf %173, %177 : vector<8x32xf32>
    %c8_i32_35 = arith.constant 8 : i32
    %179 = arith.muli %arg1, %c8_i32_35 : i32
    %c5_i32 = arith.constant 5 : i32
    %180 = arith.addi %179, %c5_i32 : i32
    %181 = arith.index_cast %180 : i32 to index
    %182 = memref.load %arg2[%181] : memref<16xi32, #tpu.memory_space<smem>>
    %183 = vector.broadcast %182 : i32 to vector<8x32xi32>
    %184 = arith.cmpi slt, %7, %183 : vector<8x32xi32>
    %185 = arith.select %184, %178, %155 : vector<8x32xi1>, vector<8x32xf32>
    %186 = arith.select %184, %176, %156 : vector<8x32xi1>, vector<8x32xf32>
    %187 = math.tanh %178 : vector<8x32xf32>
    %cst_36 = arith.constant 0.000000e+00 : f32
    %188 = vector.broadcast %cst_36 : f32 to vector<8x32xf32>
    %189 = arith.select %184, %187, %188 : vector<8x32xi1>, vector<8x32xf32>
    %c0_37 = arith.constant 0 : index
    %c768 = arith.constant 768 : index
    %190 = vector.load %arg3[%c0_37, %c768] : memref<8x1024xf32, #tpu.memory_space<vmem>>, vector<8x128xf32>
    %cst_38 = arith.constant dense<0.000000e+00> : vector<8x128xf32>
    %191 = tpu.matmul %185, %3, %cst_38 {dimension_numbers = #tpu.dot_dimension_numbers<[1], [0], [0], [1], [0, 0, 1, 1], [], []>} : vector<8x32xf32>, vector<32x128xf32>, vector<8x128xf32> -> vector<8x128xf32>
    %192 = arith.addf %190, %191 : vector<8x128xf32>
    %193 = vector.extract_strided_slice %192 {offsets = [0, 0], sizes = [8, 96], strides = [1, 1]} : vector<8x128xf32> to vector<8x96xf32>
    %194 = arith.negf %193 : vector<8x96xf32>
    %195 = math.exp %194 : vector<8x96xf32>
    %cst_39 = arith.constant 1.000000e+00 : f32
    %196 = vector.broadcast %cst_39 : f32 to vector<8x96xf32>
    %197 = arith.addf %196, %195 : vector<8x96xf32>
    %198 = arith.divf %196, %197 : vector<8x96xf32>
    %199 = vector.extract_strided_slice %192 {offsets = [0, 96], sizes = [8, 32], strides = [1, 1]} : vector<8x128xf32> to vector<8x32xf32>
    %200 = math.tanh %199 : vector<8x32xf32>
    %201 = vector.extract_strided_slice %198 {offsets = [0, 0], sizes = [8, 32], strides = [1, 1]} : vector<8x96xf32> to vector<8x32xf32>
    %202 = vector.extract_strided_slice %198 {offsets = [0, 32], sizes = [8, 32], strides = [1, 1]} : vector<8x96xf32> to vector<8x32xf32>
    %203 = vector.extract_strided_slice %198 {offsets = [0, 64], sizes = [8, 32], strides = [1, 1]} : vector<8x96xf32> to vector<8x32xf32>
    %204 = arith.mulf %202, %186 : vector<8x32xf32>
    %205 = arith.mulf %201, %200 : vector<8x32xf32>
    %206 = arith.addf %204, %205 : vector<8x32xf32>
    %207 = math.tanh %206 : vector<8x32xf32>
    %208 = arith.mulf %203, %207 : vector<8x32xf32>
    %c8_i32_40 = arith.constant 8 : i32
    %209 = arith.muli %arg1, %c8_i32_40 : i32
    %c6_i32 = arith.constant 6 : i32
    %210 = arith.addi %209, %c6_i32 : i32
    %211 = arith.index_cast %210 : i32 to index
    %212 = memref.load %arg2[%211] : memref<16xi32, #tpu.memory_space<smem>>
    %213 = vector.broadcast %212 : i32 to vector<8x32xi32>
    %214 = arith.cmpi slt, %7, %213 : vector<8x32xi32>
    %215 = arith.select %214, %208, %185 : vector<8x32xi1>, vector<8x32xf32>
    %216 = arith.select %214, %206, %186 : vector<8x32xi1>, vector<8x32xf32>
    %217 = math.tanh %208 : vector<8x32xf32>
    %cst_41 = arith.constant 0.000000e+00 : f32
    %218 = vector.broadcast %cst_41 : f32 to vector<8x32xf32>
    %219 = arith.select %214, %217, %218 : vector<8x32xi1>, vector<8x32xf32>
    %c0_42 = arith.constant 0 : index
    %c896 = arith.constant 896 : index
    %220 = vector.load %arg3[%c0_42, %c896] : memref<8x1024xf32, #tpu.memory_space<vmem>>, vector<8x128xf32>
    %cst_43 = arith.constant dense<0.000000e+00> : vector<8x128xf32>
    %221 = tpu.matmul %215, %3, %cst_43 {dimension_numbers = #tpu.dot_dimension_numbers<[1], [0], [0], [1], [0, 0, 1, 1], [], []>} : vector<8x32xf32>, vector<32x128xf32>, vector<8x128xf32> -> vector<8x128xf32>
    %222 = arith.addf %220, %221 : vector<8x128xf32>
    %223 = vector.extract_strided_slice %222 {offsets = [0, 0], sizes = [8, 96], strides = [1, 1]} : vector<8x128xf32> to vector<8x96xf32>
    %224 = arith.negf %223 : vector<8x96xf32>
    %225 = math.exp %224 : vector<8x96xf32>
    %cst_44 = arith.constant 1.000000e+00 : f32
    %226 = vector.broadcast %cst_44 : f32 to vector<8x96xf32>
    %227 = arith.addf %226, %225 : vector<8x96xf32>
    %228 = arith.divf %226, %227 : vector<8x96xf32>
    %229 = vector.extract_strided_slice %222 {offsets = [0, 96], sizes = [8, 32], strides = [1, 1]} : vector<8x128xf32> to vector<8x32xf32>
    %230 = math.tanh %229 : vector<8x32xf32>
    %231 = vector.extract_strided_slice %228 {offsets = [0, 0], sizes = [8, 32], strides = [1, 1]} : vector<8x96xf32> to vector<8x32xf32>
    %232 = vector.extract_strided_slice %228 {offsets = [0, 32], sizes = [8, 32], strides = [1, 1]} : vector<8x96xf32> to vector<8x32xf32>
    %233 = vector.extract_strided_slice %228 {offsets = [0, 64], sizes = [8, 32], strides = [1, 1]} : vector<8x96xf32> to vector<8x32xf32>
    %234 = arith.mulf %232, %216 : vector<8x32xf32>
    %235 = arith.mulf %231, %230 : vector<8x32xf32>
    %236 = arith.addf %234, %235 : vector<8x32xf32>
    %237 = math.tanh %236 : vector<8x32xf32>
    %238 = arith.mulf %233, %237 : vector<8x32xf32>
    %c8_i32_45 = arith.constant 8 : i32
    %239 = arith.muli %arg1, %c8_i32_45 : i32
    %c7_i32 = arith.constant 7 : i32
    %240 = arith.addi %239, %c7_i32 : i32
    %241 = arith.index_cast %240 : i32 to index
    %242 = memref.load %arg2[%241] : memref<16xi32, #tpu.memory_space<smem>>
    %243 = vector.broadcast %242 : i32 to vector<8x32xi32>
    %244 = arith.cmpi slt, %7, %243 : vector<8x32xi32>
    %245 = arith.select %244, %238, %215 : vector<8x32xi1>, vector<8x32xf32>
    %246 = arith.select %244, %236, %216 : vector<8x32xi1>, vector<8x32xf32>
    %247 = math.tanh %238 : vector<8x32xf32>
    %cst_46 = arith.constant 0.000000e+00 : f32
    %248 = vector.broadcast %cst_46 : f32 to vector<8x32xf32>
    %249 = arith.select %244, %247, %248 : vector<8x32xi1>, vector<8x32xf32>
    %250 = tpu.concatenate %39, %69, %99, %129, %159, %189, %219, %249 in 1 : vector<8x32xf32>, vector<8x32xf32>, vector<8x32xf32>, vector<8x32xf32>, vector<8x32xf32>, vector<8x32xf32>, vector<8x32xf32>, vector<8x32xf32> -> vector<8x256xf32>
    %c0_47 = arith.constant 0 : index
    %c0_48 = arith.constant 0 : index
    %251 = vector.load %arg5[%c0_47, %c0_48] : memref<8x256xf32, #tpu.memory_space<vmem>>, vector<8x256xf32>
    tpu.vector_store %arg5[%c0_47, %c0_48], %250 {strides = array<i32>} : memref<8x256xf32, #tpu.memory_space<vmem>>, vector<8x256xf32>,
    %c0_49 = arith.constant 0 : index
    %c0_50 = arith.constant 0 : index
    %252 = vector.load %arg6[%c0_49, %c0_50] : memref<8x32xf32, #tpu.memory_space<vmem>>, vector<8x32xf32>
    tpu.vector_store %arg6[%c0_49, %c0_50], %245 {strides = array<i32>} : memref<8x32xf32, #tpu.memory_space<vmem>>, vector<8x32xf32>,
    %c0_51 = arith.constant 0 : index
    %c0_52 = arith.constant 0 : index
    %253 = vector.load %arg7[%c0_51, %c0_52] : memref<8x32xf32, #tpu.memory_space<vmem>>, vector<8x32xf32>
    tpu.vector_store %arg7[%c0_51, %c0_52], %246 {strides = array<i32>} : memref<8x32xf32, #tpu.memory_space<vmem>>, vector<8x32xf32>,
    return
  }
  func.func @transform_0(%arg0: i32, %arg1: i32, %arg2: memref<16xi32, #tpu.memory_space<smem>>) -> (i32, i32) {
    %c0_i32 = arith.constant 0 : i32
    return %arg0, %arg1 : i32, i32
  }
  func.func @transform_1(%arg0: i32, %arg1: i32, %arg2: memref<16xi32, #tpu.memory_space<smem>>) -> (i32, i32) {
    %c0_i32 = arith.constant 0 : i32
    %c0_i32_0 = arith.constant 0 : i32
    %c0_i32_1 = arith.constant 0 : i32
    return %c0_i32, %c0_i32_0 : i32, i32
  }
  func.func @transform_2(%arg0: i32, %arg1: i32, %arg2: memref<16xi32, #tpu.memory_space<smem>>) -> (i32, i32) {
    %c0_i32 = arith.constant 0 : i32
    return %arg0, %arg1 : i32, i32
  }
}

</mosaic_0001>

<llo_original>
// kernel: tpu_custom_call.1
$region0: #{tpu_custom_call.1}
  #allocation0 [shape = 'u32[]', space=smem, size = 0x4, offset = 0x4, fixed_abs, tag = 'smem constant byte address 0x4 - core index']
  #allocation1 [shape = 'u32[72,128]{1,0:T(1,128)}', space=vmem, size = 0x9000, scoped, tag = 'internal scratch']
  #allocation2 [shape = 'f32[8,32]{1,0:T(8,128)}', space=vmem, size = 0x1000, scoped, tag = 'scratch operand']
  #allocation3 [shape = 'f32[8,32]{1,0:T(8,128)}', space=vmem, size = 0x1000, scoped, tag = 'scratch operand']
  #allocation4 [shape = 's32[1]{0}', space=sflag, size = 0x4, scoped, tag = 'scoped memory for tpu_custom_call.1']
  #allocation5 [shape = 'u8[512]{0}', space=smem, size = 0x200, scoped, tag = 'prefetched SMEM operand 0']
  %s0 = inlined_call_operand.hbm [shape: s32[16], index: 0, kind: input, shape index: {}]
  %s1 = inlined_call_operand.hbm [shape: f32[8,2048], index: 1, kind: input, shape index: {}]
  %s2 = inlined_call_operand.hbm [shape: f32[32,128], index: 2, kind: input, shape index: {}]
  %s3 = inlined_call_operand.hbm [shape: f32[8,512], index: 3, kind: output, shape index: {}]
  %s4 = sld [smem:[#allocation0]]
  $region53: #{tpu_custom_call.1} parent=0
    _
  %s6 = ssub.s32 1, %s4
  %s7 = scalar_select 0, %s6, %s4
  %s9 = sshll.u32 %s0, 4
  %s10 = int_to_ptr.hbm [resolvable:$true] %s9
  %12 = dma.hbm_to_smem %s10, 16, [#allocation5], [#allocation4]
  %14 = dma.done [#allocation4], 16
  %15 = sfence
  $region1: #{tpu_custom_call.1} parent=0
    #allocation6 [shape = 'u8[65536]{0}', space=vmem, size = 0x10000, scoped, tag = 'input window, operand 1']
    #allocation7 [shape = 's32[2]{0}', space=sflag, size = 0x8, scoped, tag = 'scoped memory for tpu_custom_call.1']
    #allocation8 [shape = 's32[2]{0}', space=sflag, size = 0x8, scoped, tag = 'scoped memory for tpu_custom_call.1']
    #allocation9 [shape = 'u8[16384]{0}', space=vmem, size = 0x4000, scoped, tag = 'input window, operand 2, single buffered']
    #allocation10 [shape = 's32[1]{0}', space=sflag, size = 0x4, scoped, tag = 'scoped memory for tpu_custom_call.1']
    #allocation11 [shape = 'u8[16384]{0}', space=vmem, size = 0x4000, scoped, tag = 'output window, operand 0']
    %16 = vsyncpa [#allocation7], 0
    %s17 = scalar_lea.sflag [#allocation7], 1
    %18 = vsyncpa %s17, 0
    %19 = vsyncpa [#allocation10], 0
    %20 = vsyncpa [#allocation8], 0
    %s21 = scalar_lea.sflag [#allocation8], 1
    %22 = vsyncpa %s21, 0
    loop: start=0, step=1, limit=4
    $region2: #{tpu_custom_call.1} parent=1 // loop_pre_header
      _
    $region3: #{tpu_custom_call.1} parent=1 // loop_header
      %s24 = sphi 0, %s28
      %p25 = scmp.ge.s32.totalorder %s24, 4
      %s31 = sphi 0, %s43
      %s32 = sphi 0, %s39
      %s33 = sphi 0, %s31
      %s34 = sphi 0, %s32
      %s35 = sphi 0, %s33
      %s36 = sphi 0, %s34
      %s48 = sphi 0, %s50
      %s51 = sphi 0, %s48
      %s52 = sphi 0, %s51
      %s68 = sphi 0, %s52
      %s72 = sphi 0, %s72
      %s74 = sphi 0, %s72
      %s75 = sphi 0, %s74
      %s89 = sphi 0, %s75
      %s97 = sphi 0, %s99
      %s100 = sphi 0, %s97
      %s101 = sphi 0, %s100
      %s117 = sphi 0, %s101
    $region4: #{tpu_custom_call.1} parent=1 // loop_header_branch
      %27 = sbr.rel (%p25) target = $region8
    $region5: #{tpu_custom_call.1} parent=1 // loop_body
      %s29 = ssub.s32 %s24, 1
      %s30 = ssub.s32 %s24, 2
      %s37 = sadd.s32 1, %s32
      %p38 = scmp.ge.s32.totalorder %s37, 2
      %s39 = scalar_select %p38, 0, %s37
      %s40 = sadd.s32 1, %s31
      %s41 = scalar_select %p38, %s40, %s31
      %p42 = scmp.ge.s32.totalorder %s41, 1
      %s43 = scalar_select %p42, 0, %s41
      %s44 = ssub.s32 %s31, %s43
      %s45 = ssub.s32 %s32, %s39
      %s46 = sor.u32 %s44, %s45
      %p47 = scmp.eq.s32.totalorder %s46, 0
      %s49 = sadd.s32 %s48, 1
      %s50 = scalar_select %p47, %s48, %s49
      %p53 = pneg %p47
      %p54 = scmp.eq.s32.totalorder %s24, 1
      %p55 = por %p53, %p54
      %p56 = scmp.ne.s32.totalorder %s48, %s51
      %p57 = scmp.eq.s32.totalorder %s24, 0
      %p58 = por %p56, %p57
      %p59 = scmp.ne.s32.totalorder %s48, %s51
      %p60 = scmp.eq.s32.totalorder %s29, 1
      %p61 = por %p59, %p60
      %p62 = scmp.ne.s32.totalorder %s51, %s52
      %p63 = scmp.eq.s32.totalorder %s29, 0
      %p64 = por %p62, %p63
      %p65 = scmp.ne.s32.totalorder %s51, %s52
      %p66 = scmp.eq.s32.totalorder %s30, 1
      %p67 = por %p65, %p66
      %p69 = scmp.ne.s32.totalorder %s52, %s68
      %p70 = scmp.eq.s32.totalorder %s30, 0
      %p71 = por %p69, %p70
      %s73 = sadd.s32 %s72, 1
      %p76 = scmp.eq.s32.totalorder %s24, 1
      %p77 = scmp.ne.s32.totalorder %s72, %s74
      %p78 = scmp.eq.s32.totalorder %s24, 0
      %p79 = por %p77, %p78
      %p80 = scmp.ne.s32.totalorder %s72, %s74
      %p81 = scmp.eq.s32.totalorder %s29, 1
      %p82 = por %p80, %p81
      %p83 = scmp.ne.s32.totalorder %s74, %s75
      %p84 = scmp.eq.s32.totalorder %s29, 0
      %p85 = por %p83, %p84
      %p86 = scmp.ne.s32.totalorder %s74, %s75
      %p87 = scmp.eq.s32.totalorder %s30, 1
      %p88 = por %p86, %p87
      %p90 = scmp.ne.s32.totalorder %s75, %s89
      %p91 = scmp.eq.s32.totalorder %s30, 0
      %p92 = por %p90, %p91
      %s93 = ssub.s32 %s31, %s43
      %s94 = ssub.s32 %s32, %s39
      %s95 = sor.u32 %s93, %s94
      %p96 = scmp.eq.s32.totalorder %s95, 0
      %s98 = sadd.s32 %s97, 1
      %s99 = scalar_select %p96, %s97, %s98
      %p102 = pneg %p96
      %p103 = scmp.eq.s32.totalorder %s24, 1
      %p104 = por %p102, %p103
      %p105 = scmp.ne.s32.totalorder %s97, %s100
      %p106 = scmp.eq.s32.totalorder %s24, 0
      %p107 = por %p105, %p106
      %p108 = scmp.ne.s32.totalorder %s97, %s100
      %p109 = scmp.eq.s32.totalorder %s29, 1
      %p110 = por %p108, %p109
      %p111 = scmp.ne.s32.totalorder %s100, %s101
      %p112 = scmp.eq.s32.totalorder %s29, 0
      %p113 = por %p111, %p112
      %p114 = scmp.ne.s32.totalorder %s100, %s101
      %p115 = scmp.eq.s32.totalorder %s30, 1
      %p116 = por %p114, %p115
      %p118 = scmp.ne.s32.totalorder %s101, %s117
      %p119 = scmp.eq.s32.totalorder %s30, 0
      %p120 = por %p118, %p119
      %p121 = scmp.le.s32.totalorder 1, %s24
      %p122 = scmp.lt.s32.totalorder %s24, 3
      %p123 = pnand %p121, %p122
      %p124 = pneg %p123
      // Predicated region
      $region9: #{tpu_custom_call.1} parent=5 // pred_check
        _
      $region10: #{tpu_custom_call.1} parent=5 // pred_check_branch
        %126 = sbr.rel (%p123) target = $region12
      $region11: #{tpu_custom_call.1} parent=5 // pred_region
        %s127 = ssub.s32 %s24, 1
        // Predicated region
        $region13: #{tpu_custom_call.1} parent=11 // pred_check
          %p128 = pneg %p85
        $region14: #{tpu_custom_call.1} parent=11 // pred_check_branch
          %130 = sbr.rel (%p128) target = $region16
        $region15: #{tpu_custom_call.1} parent=11 // pred_region
          %132 = vsyncadd [#allocation10], 0
          %s133 = sshll.u32 %s2, 4
          %s134 = int_to_ptr.hbm [resolvable:$true] %s133
          %s135 = sshll.u32 [#allocation9], 4
          %s136 = int_to_ptr.vmem [resolvable:$true] %s135
          %141 = dma.hbm_to_vmem [thread:$0]  %s134, 512, %s136, [#allocation10], 128, 128, 8
        $region16: #{tpu_custom_call.1} parent=11 // pred_fallthru
          _
      $region12: #{tpu_custom_call.1} parent=5 // pred_fallthru
        _
      %p142 = scmp.lt.s32.totalorder %s24, 2
      // Predicated region
      $region17: #{tpu_custom_call.1} parent=5 // pred_check
        %p143 = pneg %p142
      $region18: #{tpu_custom_call.1} parent=5 // pred_check_branch
        %145 = sbr.rel (%p143) target = $region20
      $region19: #{tpu_custom_call.1} parent=5 // pred_region
        // Predicated region
        $region21: #{tpu_custom_call.1} parent=19 // pred_check
          %p146 = pneg %p58
        $region22: #{tpu_custom_call.1} parent=19 // pred_check_branch
          %148 = sbr.rel (%p146) target = $region24
        $region23: #{tpu_custom_call.1} parent=19 // pred_region
          %s149 = sand.u32 %s48, 1
          %s150 = scalar_lea.sflag [#allocation7], %s149
          %s151 = sand.u32 %s48, 1
          %s152 = smul.addr %s151, 64
          %s153 = scalar_lea.vmem [#allocation6], %s152
          %s154 = smul.u32 8, %s32
          %156 = vsyncadd %s150, 0
          %s157 = smul.addr %s31, 16
          %s158 = sadd.s32 %s154, %s157
          %s159 = smul.addr %s158, 8
          %s160 = scalar_lea.hbm %s1, %s159
          %s162 = sshll.u32 %s160, 4
          %s163 = int_to_ptr.hbm [resolvable:$true] %s162
          %s164 = sshll.u32 %s153, 4
          %s165 = int_to_ptr.vmem [resolvable:$true] %s164
          %167 = dma.hbm_to_vmem [thread:$0]  %s163, 1024, %s165, %s150
        $region24: #{tpu_custom_call.1} parent=19 // pred_fallthru
          _
      $region20: #{tpu_custom_call.1} parent=5 // pred_fallthru
        _
      %p168 = scmp.le.s32.totalorder 1, %s24
      %p169 = scmp.lt.s32.totalorder %s24, 3
      %p170 = pnand %p168, %p169
      %p171 = pneg %p170
      // Predicated region
      $region25: #{tpu_custom_call.1} parent=5 // pred_check
        _
      $region26: #{tpu_custom_call.1} parent=5 // pred_check_branch
        %173 = sbr.rel (%p170) target = $region28
      $region27: #{tpu_custom_call.1} parent=5 // pred_region
        %s174 = ssub.s32 %s24, 1
        %s175 = sand.u32 %s51, 1
        %s176 = scalar_lea.sflag [#allocation7], %s175
        %s177 = sand.u32 %s51, 1
        %s178 = smul.addr %s177, 64
        %s179 = scalar_lea.vmem [#allocation6], %s178
        // Predicated region
        $region29: #{tpu_custom_call.1} parent=27 // pred_check
          %p180 = pneg %p64
        $region30: #{tpu_custom_call.1} parent=27 // pred_check_branch
          %182 = sbr.rel (%p180) target = $region32
        $region31: #{tpu_custom_call.1} parent=27 // pred_region
          %184 = dma.done %s176, 1024
        $region32: #{tpu_custom_call.1} parent=27 // pred_fallthru
          _
        // Predicated region
        $region33: #{tpu_custom_call.1} parent=27 // pred_check
          %p185 = pneg %p85
        $region34: #{tpu_custom_call.1} parent=27 // pred_check_branch
          %187 = sbr.rel (%p185) target = $region36
        $region35: #{tpu_custom_call.1} parent=27 // pred_region
          %189 = dma.done [#allocation10], 512
        $region36: #{tpu_custom_call.1} parent=27 // pred_fallthru
          _
        %s190 = sand.u32 %s51, 1
        %s191 = scalar_lea.sflag [#allocation7], %s190
        %s192 = sand.u32 %s51, 1
        %s193 = smul.addr %s192, 64
        %s194 = scalar_lea.vmem [#allocation6], %s193
        %p195 = pneg %p64
        %p196 = pneg %p61
        %p197 = pneg %p85
        %p198 = pneg %p82
        %p199 = pneg %p113
        %p200 = pneg %p110
        %s201 = sand.u32 %s100, 1
        %s202 = scalar_lea.sflag [#allocation8], %s201
        %s203 = sand.u32 %s100, 1
        %s204 = smul.addr %s203, 16
        %s205 = scalar_lea.vmem [#allocation11], %s204
        %s206 = smul.u32 8, %s34
        %s207 = smul.u32 2, %s34
        %p208 = scmp.eq.s32.totalorder %s34, 0
        // Predicated region
        $region37: #{tpu_custom_call.1} parent=27 // pred_check
          %p209 = pneg %p208
        $region38: #{tpu_custom_call.1} parent=27 // pred_check_branch
          %211 = sbr.rel (%p209) target = $region40
        $region39: #{tpu_custom_call.1} parent=27 // pred_region
          %vm212 = vcmask 261120
          %213 = vst.msk [vmem:[#allocation2] sm:$0xff] %vm212, 0.0
          %214 = vst.msk [vmem:[#allocation3] sm:$0xff] %vm212, 0.0
        $region40: #{tpu_custom_call.1} parent=27 // pred_fallthru
          _
        %v215 = vld [vmem:[#allocation9] sm:$0xff]
        %v216 = vld [vmem:[#allocation9 + $0x8] sm:$0xff]
        %v217 = vld [vmem:[#allocation9 + $0x10] sm:$0xff]
        %v218 = vld [vmem:[#allocation9 + $0x18] sm:$0xff]
        %v219 = vlaneseq
        %v220 = vshrl.u32 %v219, 7
        %s221 = smul.u32 %s33, 8
        %v222 = vstv %s221
        %v223 = vadd.s32 %v220, %v222
        %v224 = vld [vmem:[#allocation2] sm:$0xff]
        %v225 = vld [vmem:[#allocation3] sm:$0xff]
        %v226 = vld [vmem:[%s179] sm:$0xff]
        %vm227 = vcmask 261120
        %v229 = vsel %vm227, %v224, 0
        %231 = vmatpush.msra.mxu0 0.0
        %232 = vmatpush.msra.mxu0 0.0
        %233 = vmatpush.msra.mxu0 0.0
        %234 = vmatpush.msra.mxu0 0.0
        %235 = vmatpush.msra.mxu0 0.0
        %236 = vmatpush.msra.mxu0 0.0
        %237 = vmatpush.msra.mxu0 0.0
        %238 = vmatpush.msra.mxu0 0.0
        %239 = vmatpush.msra.mxu0 0.0
        %240 = vmatpush.msra.mxu0 0.0
        %241 = vmatpush.msra.mxu0 0.0
        %242 = vmatpush.msra.mxu0 0.0
        %243 = vmatpush.msra.mxu0 %v218
        %244 = vmatpush.msra.mxu0 %v217
        %245 = vmatpush.msra.mxu0 %v216
        %246 = vmatpush.msra.mxu0 %v215
        %247 = vmatmul.f32.gmra.mxu0 %v229
        %v248 = vpop.f32.mrf.mxu0
        %v249 = vadd.f32 0.0, %v248
        %250 = vdwg.mxu0
        %v251 = vadd.f32 %v226, %v249
        %v252 = vxor.u32 %v251, 2147483648
        %v253 = vmul.f32 %v252, 1.442695
        %v254 = vpow.pop %v253
        %v255 = vadd.f32 %v254, 1.0
        %v256 = vrcp.pop %v255
        %v257 = vmul.f32 %v255, %v256
        %v258 = vsub.f32 1.0, %v257
        %v259 = vmul.f32 %v256, %v258
        %v260 = vadd.f32 %v256, %v259
        %vm261 = vweird.f32 %v255
        %vm262 = vweird.f32 %v256
        %vm263 = vmor %vm261, %vm262
        %v264 = vsel %vm263, %v256, %v260
        %v265 = vand.u32 2147483647, %v255
        %vm266 = vcmp.eq.f32.partialorder %v265, 8.507059e+37
        %v267 = vand.u32 %v255, 2147483648
        %v268 = vor.u32 1.1754944e-38, %v267
        %v269 = vsel %vm266, %v268, %v264
        %v270 = vmul.f32 1.0, %v269
        %v271 = vtanh.pop %v251
        %273 = vrot.lane.b32.xlu0 %v225, 32
        %v274 = vpop.permute.xlu0 %273
        %v276 = vmul.f32 %v270, %v274
        %278 = vrot.lane.b32.xlu0 %v271, 32
        %v279 = vpop.permute.xlu0 %278
        %v281 = vmul.f32 %v270, %v279
        %283 = vrot.lane.b32.xlu0 %v281, 32
        %v284 = vpop.permute.xlu0 %283
        %v286 = vadd.f32 %v276, %v284
        %v287 = vtanh.pop %v286
        %289 = vrot.lane.b32.xlu0 %v287, 32
        %v290 = vpop.permute.xlu0 %289
        %v292 = vmul.f32 %v270, %v290
        %s293 = smul.u32 %s34, 8
        %s294 = sld [smem:[#allocation5 + %s293]]
        %v295 = vstv %s294
        %vm296 = vcmp.lt.s32.totalorder %v223, %v295
        %297 = vrot.lane.b32.xlu0 %v224, 64
        %v298 = vpop.permute.xlu0 %297
        %v300 = vsel %vm296, %v292, %v298
        %v301 = vsel %vm296, %v286, %v274
        %v302 = vtanh.pop %v292
        %v303 = vsel %vm296, %v302, 0.0
        %v304 = vld [vmem:[%s179 + $0x8] sm:$0xff]
        %306 = vrot.lane.b32.xlu0 %v300, 64
        %v307 = vpop.permute.xlu0 %306
        %v308 = vsel %vm227, %v307, 0
        %310 = vmatpush.msra.mxu0 0.0
        %311 = vmatpush.msra.mxu0 0.0
        %312 = vmatpush.msra.mxu0 0.0
        %313 = vmatpush.msra.mxu0 0.0
        %314 = vmatpush.msra.mxu0 0.0
        %315 = vmatpush.msra.mxu0 0.0
        %316 = vmatpush.msra.mxu0 0.0
        %317 = vmatpush.msra.mxu0 0.0
        %318 = vmatpush.msra.mxu0 0.0
        %319 = vmatpush.msra.mxu0 0.0
        %320 = vmatpush.msra.mxu0 0.0
        %321 = vmatpush.msra.mxu0 0.0
        %322 = vmatpush.msra.mxu0 %v218
        %323 = vmatpush.msra.mxu0 %v217
        %324 = vmatpush.msra.mxu0 %v216
        %325 = vmatpush.msra.mxu0 %v215
        %326 = vmatmul.f32.gmra.mxu0 %v308
        %v327 = vpop.f32.mrf.mxu0
        %v328 = vadd.f32 0.0, %v327
        %329 = vdwg.mxu0
        %v330 = vadd.f32 %v304, %v328
        %v331 = vxor.u32 %v330, 2147483648
        %v332 = vmul.f32 %v331, 1.442695
        %v333 = vpow.pop %v332
        %v334 = vadd.f32 %v333, 1.0
        %v335 = vrcp.pop %v334
        %v336 = vmul.f32 %v334, %v335
        %v337 = vsub.f32 1.0, %v336
        %v338 = vmul.f32 %v335, %v337
        %v339 = vadd.f32 %v335, %v338
        %vm340 = vweird.f32 %v334
        %vm341 = vweird.f32 %v335
        %vm342 = vmor %vm340, %vm341
        %v343 = vsel %vm342, %v335, %v339
        %v344 = vand.u32 2147483647, %v334
        %vm345 = vcmp.eq.f32.partialorder %v344, 8.507059e+37
        %v346 = vand.u32 %v334, 2147483648
        %v347 = vor.u32 1.1754944e-38, %v346
        %v348 = vsel %vm345, %v347, %v343
        %v349 = vmul.f32 1.0, %v348
        %v350 = vtanh.pop %v330
        %v351 = vmul.f32 %v349, %v301
        %353 = vrot.lane.b32.xlu0 %v350, 32
        %v354 = vpop.permute.xlu0 %353
        %v356 = vmul.f32 %v349, %v354
        %358 = vrot.lane.b32.xlu0 %v356, 32
        %v359 = vpop.permute.xlu0 %358
        %v361 = vadd.f32 %v351, %v359
        %v362 = vtanh.pop %v361
        %364 = vrot.lane.b32.xlu0 %v362, 32
        %v365 = vpop.permute.xlu0 %364
        %v367 = vmul.f32 %v349, %v365
        %s368 = sadd.s32 %s293, 1
        %s369 = sld [smem:[#allocation5 + %s368]]
        %v370 = vstv %s369
        %vm371 = vcmp.lt.s32.totalorder %v223, %v370
        %v372 = vsel %vm371, %v367, %v300
        %v373 = vsel %vm371, %v361, %v301
        %v374 = vtanh.pop %v367
        %v375 = vsel %vm371, %v374, 0.0
        %v376 = vld [vmem:[%s179 + $0x10] sm:$0xff]
        %378 = vrot.lane.b32.xlu0 %v372, 64
        %v379 = vpop.permute.xlu0 %378
        %v380 = vsel %vm227, %v379, 0
        %382 = vmatpush.msra.mxu0 0.0
        %383 = vmatpush.msra.mxu0 0.0
        %384 = vmatpush.msra.mxu0 0.0
        %385 = vmatpush.msra.mxu0 0.0
        %386 = vmatpush.msra.mxu0 0.0
        %387 = vmatpush.msra.mxu0 0.0
        %388 = vmatpush.msra.mxu0 0.0
        %389 = vmatpush.msra.mxu0 0.0
        %390 = vmatpush.msra.mxu0 0.0
        %391 = vmatpush.msra.mxu0 0.0
        %392 = vmatpush.msra.mxu0 0.0
        %393 = vmatpush.msra.mxu0 0.0
        %394 = vmatpush.msra.mxu0 %v218
        %395 = vmatpush.msra.mxu0 %v217
        %396 = vmatpush.msra.mxu0 %v216
        %397 = vmatpush.msra.mxu0 %v215
        %398 = vmatmul.f32.gmra.mxu0 %v380
        %v399 = vpop.f32.mrf.mxu0
        %v400 = vadd.f32 0.0, %v399
        %401 = vdwg.mxu0
        %v402 = vadd.f32 %v376, %v400
        %v403 = vxor.u32 %v402, 2147483648
        %v404 = vmul.f32 %v403, 1.442695
        %v405 = vpow.pop %v404
        %v406 = vadd.f32 %v405, 1.0
        %v407 = vrcp.pop %v406
        %v408 = vmul.f32 %v406, %v407
        %v409 = vsub.f32 1.0, %v408
        %v410 = vmul.f32 %v407, %v409
        %v411 = vadd.f32 %v407, %v410
        %vm412 = vweird.f32 %v406
        %vm413 = vweird.f32 %v407
        %vm414 = vmor %vm412, %vm413
        %v415 = vsel %vm414, %v407, %v411
        %v416 = vand.u32 2147483647, %v406
        %vm417 = vcmp.eq.f32.partialorder %v416, 8.507059e+37
        %v418 = vand.u32 %v406, 2147483648
        %v419 = vor.u32 1.1754944e-38, %v418
        %v420 = vsel %vm417, %v419, %v415
        %v421 = vmul.f32 1.0, %v420
        %v422 = vtanh.pop %v402
        %v423 = vmul.f32 %v421, %v373
        %425 = vrot.lane.b32.xlu0 %v422, 32
        %v426 = vpop.permute.xlu0 %425
        %v428 = vmul.f32 %v421, %v426
        %430 = vrot.lane.b32.xlu0 %v428, 32
        %v431 = vpop.permute.xlu0 %430
        %v433 = vadd.f32 %v423, %v431
        %v434 = vtanh.pop %v433
        %436 = vrot.lane.b32.xlu0 %v434, 32
        %v437 = vpop.permute.xlu0 %436
        %v439 = vmul.f32 %v421, %v437
        %s440 = sadd.s32 %s293, 2
        %s441 = sld [smem:[#allocation5 + %s440]]
        %v442 = vstv %s441
        %vm443 = vcmp.lt.s32.totalorder %v223, %v442
        %v444 = vsel %vm443, %v439, %v372
        %v445 = vsel %vm443, %v433, %v373
        %v446 = vtanh.pop %v439
        %v447 = vsel %vm443, %v446, 0.0
        %v448 = vld [vmem:[%s179 + $0x18] sm:$0xff]
        %450 = vrot.lane.b32.xlu0 %v444, 64
        %v451 = vpop.permute.xlu0 %450
        %v452 = vsel %vm227, %v451, 0
        %454 = vmatpush.msra.mxu0 0.0
        %455 = vmatpush.msra.mxu0 0.0
        %456 = vmatpush.msra.mxu0 0.0
        %457 = vmatpush.msra.mxu0 0.0
        %458 = vmatpush.msra.mxu0 0.0
        %459 = vmatpush.msra.mxu0 0.0
        %460 = vmatpush.msra.mxu0 0.0
        %461 = vmatpush.msra.mxu0 0.0
        %462 = vmatpush.msra.mxu0 0.0
        %463 = vmatpush.msra.mxu0 0.0
        %464 = vmatpush.msra.mxu0 0.0
        %465 = vmatpush.msra.mxu0 0.0
        %466 = vmatpush.msra.mxu0 %v218
        %467 = vmatpush.msra.mxu0 %v217
        %468 = vmatpush.msra.mxu0 %v216
        %469 = vmatpush.msra.mxu0 %v215
        %470 = vmatmul.f32.gmra.mxu0 %v452
        %v471 = vpop.f32.mrf.mxu0
        %v472 = vadd.f32 0.0, %v471
        %473 = vdwg.mxu0
        %v474 = vadd.f32 %v448, %v472
        %v475 = vxor.u32 %v474, 2147483648
        %v476 = vmul.f32 %v475, 1.442695
        %v477 = vpow.pop %v476
        %v478 = vadd.f32 %v477, 1.0
        %v479 = vrcp.pop %v478
        %v480 = vmul.f32 %v478, %v479
        %v481 = vsub.f32 1.0, %v480
        %v482 = vmul.f32 %v479, %v481
        %v483 = vadd.f32 %v479, %v482
        %vm484 = vweird.f32 %v478
        %vm485 = vweird.f32 %v479
        %vm486 = vmor %vm484, %vm485
        %v487 = vsel %vm486, %v479, %v483
        %v488 = vand.u32 2147483647, %v478
        %vm489 = vcmp.eq.f32.partialorder %v488, 8.507059e+37
        %v490 = vand.u32 %v478, 2147483648
        %v491 = vor.u32 1.1754944e-38, %v490
        %v492 = vsel %vm489, %v491, %v487
        %v493 = vmul.f32 1.0, %v492
        %v494 = vtanh.pop %v474
        %v495 = vmul.f32 %v493, %v445
        %497 = vrot.lane.b32.xlu0 %v494, 32
        %v498 = vpop.permute.xlu0 %497
        %v500 = vmul.f32 %v493, %v498
        %502 = vrot.lane.b32.xlu0 %v500, 32
        %v503 = vpop.permute.xlu0 %502
        %v505 = vadd.f32 %v495, %v503
        %v506 = vtanh.pop %v505
        %508 = vrot.lane.b32.xlu0 %v506, 32
        %v509 = vpop.permute.xlu0 %508
        %v511 = vmul.f32 %v493, %v509
        %s512 = sadd.s32 %s293, 3
        %s513 = sld [smem:[#allocation5 + %s512]]
        %v514 = vstv %s513
        %vm515 = vcmp.lt.s32.totalorder %v223, %v514
        %v516 = vsel %vm515, %v511, %v444
        %v517 = vsel %vm515, %v505, %v445
        %v518 = vtanh.pop %v511
        %v519 = vsel %vm515, %v518, 0.0
        %v520 = vld [vmem:[%s179 + $0x20] sm:$0xff]
        %522 = vrot.lane.b32.xlu0 %v516, 64
        %v523 = vpop.permute.xlu0 %522
        %v524 = vsel %vm227, %v523, 0
        %526 = vmatpush.msra.mxu0 0.0
        %527 = vmatpush.msra.mxu0 0.0
        %528 = vmatpush.msra.mxu0 0.0
        %529 = vmatpush.msra.mxu0 0.0
        %530 = vmatpush.msra.mxu0 0.0
        %531 = vmatpush.msra.mxu0 0.0
        %532 = vmatpush.msra.mxu0 0.0
        %533 = vmatpush.msra.mxu0 0.0
        %534 = vmatpush.msra.mxu0 0.0
        %535 = vmatpush.msra.mxu0 0.0
        %536 = vmatpush.msra.mxu0 0.0
        %537 = vmatpush.msra.mxu0 0.0
        %538 = vmatpush.msra.mxu0 %v218
        %539 = vmatpush.msra.mxu0 %v217
        %540 = vmatpush.msra.mxu0 %v216
        %541 = vmatpush.msra.mxu0 %v215
        %542 = vmatmul.f32.gmra.mxu0 %v524
        %v543 = vpop.f32.mrf.mxu0
        %v544 = vadd.f32 0.0, %v543
        %545 = vdwg.mxu0
        %v546 = vadd.f32 %v520, %v544
        %v547 = vxor.u32 %v546, 2147483648
        %v548 = vmul.f32 %v547, 1.442695
        %v549 = vpow.pop %v548
        %v550 = vadd.f32 %v549, 1.0
        %v551 = vrcp.pop %v550
        %v552 = vmul.f32 %v550, %v551
        %v553 = vsub.f32 1.0, %v552
        %v554 = vmul.f32 %v551, %v553
        %v555 = vadd.f32 %v551, %v554
        %vm556 = vweird.f32 %v550
        %vm557 = vweird.f32 %v551
        %vm558 = vmor %vm556, %vm557
        %v559 = vsel %vm558, %v551, %v555
        %v560 = vand.u32 2147483647, %v550
        %vm561 = vcmp.eq.f32.partialorder %v560, 8.507059e+37
        %v562 = vand.u32 %v550, 2147483648
        %v563 = vor.u32 1.1754944e-38, %v562
        %v564 = vsel %vm561, %v563, %v559
        %v565 = vmul.f32 1.0, %v564
        %v566 = vtanh.pop %v546
        %v567 = vmul.f32 %v565, %v517
        %569 = vrot.lane.b32.xlu0 %v566, 32
        %v570 = vpop.permute.xlu0 %569
        %v572 = vmul.f32 %v565, %v570
        %574 = vrot.lane.b32.xlu0 %v572, 32
        %v575 = vpop.permute.xlu0 %574
        %v577 = vadd.f32 %v567, %v575
        %v578 = vtanh.pop %v577
        %580 = vrot.lane.b32.xlu0 %v578, 32
        %v581 = vpop.permute.xlu0 %580
        %v583 = vmul.f32 %v565, %v581
        %s584 = sadd.s32 %s293, 4
        %s585 = sld [smem:[#allocation5 + %s584]]
        %v586 = vstv %s585
        %vm587 = vcmp.lt.s32.totalorder %v223, %v586
        %v588 = vsel %vm587, %v583, %v516
        %v589 = vsel %vm587, %v577, %v517
        %v590 = vtanh.pop %v583
        %v591 = vsel %vm587, %v590, 0.0
        %v592 = vld [vmem:[%s179 + $0x28] sm:$0xff]
        %594 = vrot.lane.b32.xlu0 %v588, 64
        %v595 = vpop.permute.xlu0 %594
        %v596 = vsel %vm227, %v595, 0
        %598 = vmatpush.msra.mxu0 0.0
        %599 = vmatpush.msra.mxu0 0.0
        %600 = vmatpush.msra.mxu0 0.0
        %601 = vmatpush.msra.mxu0 0.0
        %602 = vmatpush.msra.mxu0 0.0
        %603 = vmatpush.msra.mxu0 0.0
        %604 = vmatpush.msra.mxu0 0.0
        %605 = vmatpush.msra.mxu0 0.0
        %606 = vmatpush.msra.mxu0 0.0
        %607 = vmatpush.msra.mxu0 0.0
        %608 = vmatpush.msra.mxu0 0.0
        %609 = vmatpush.msra.mxu0 0.0
        %610 = vmatpush.msra.mxu0 %v218
        %611 = vmatpush.msra.mxu0 %v217
        %612 = vmatpush.msra.mxu0 %v216
        %613 = vmatpush.msra.mxu0 %v215
        %614 = vmatmul.f32.gmra.mxu0 %v596
        %v615 = vpop.f32.mrf.mxu0
        %v616 = vadd.f32 0.0, %v615
        %617 = vdwg.mxu0
        %v618 = vadd.f32 %v592, %v616
        %v619 = vxor.u32 %v618, 2147483648
        %v620 = vmul.f32 %v619, 1.442695
        %v621 = vpow.pop %v620
        %v622 = vadd.f32 %v621, 1.0
        %v623 = vrcp.pop %v622
        %v624 = vmul.f32 %v622, %v623
        %v625 = vsub.f32 1.0, %v624
        %v626 = vmul.f32 %v623, %v625
        %v627 = vadd.f32 %v623, %v626
        %vm628 = vweird.f32 %v622
        %vm629 = vweird.f32 %v623
        %vm630 = vmor %vm628, %vm629
        %v631 = vsel %vm630, %v623, %v627
        %v632 = vand.u32 2147483647, %v622
        %vm633 = vcmp.eq.f32.partialorder %v632, 8.507059e+37
        %v634 = vand.u32 %v622, 2147483648
        %v635 = vor.u32 1.1754944e-38, %v634
        %v636 = vsel %vm633, %v635, %v631
        %v637 = vmul.f32 1.0, %v636
        %v638 = vtanh.pop %v618
        %v639 = vmul.f32 %v637, %v589
        %641 = vrot.lane.b32.xlu0 %v638, 32
        %v642 = vpop.permute.xlu0 %641
        %v644 = vmul.f32 %v637, %v642
        %646 = vrot.lane.b32.xlu0 %v644, 32
        %v647 = vpop.permute.xlu0 %646
        %v649 = vadd.f32 %v639, %v647
        %v650 = vtanh.pop %v649
        %652 = vrot.lane.b32.xlu0 %v650, 32
        %v653 = vpop.permute.xlu0 %652
        %v655 = vmul.f32 %v637, %v653
        %s656 = sadd.s32 %s293, 5
        %s657 = sld [smem:[#allocation5 + %s656]]
        %v658 = vstv %s657
        %vm659 = vcmp.lt.s32.totalorder %v223, %v658
        %v660 = vsel %vm659, %v655, %v588
        %v661 = vsel %vm659, %v649, %v589
        %v662 = vtanh.pop %v655
        %v663 = vsel %vm659, %v662, 0.0
        %v664 = vld [vmem:[%s179 + $0x30] sm:$0xff]
        %666 = vrot.lane.b32.xlu0 %v660, 64
        %v667 = vpop.permute.xlu0 %666
        %v668 = vsel %vm227, %v667, 0
        %670 = vmatpush.msra.mxu0 0.0
        %671 = vmatpush.msra.mxu0 0.0
        %672 = vmatpush.msra.mxu0 0.0
        %673 = vmatpush.msra.mxu0 0.0
        %674 = vmatpush.msra.mxu0 0.0
        %675 = vmatpush.msra.mxu0 0.0
        %676 = vmatpush.msra.mxu0 0.0
        %677 = vmatpush.msra.mxu0 0.0
        %678 = vmatpush.msra.mxu0 0.0
        %679 = vmatpush.msra.mxu0 0.0
        %680 = vmatpush.msra.mxu0 0.0
        %681 = vmatpush.msra.mxu0 0.0
        %682 = vmatpush.msra.mxu0 %v218
        %683 = vmatpush.msra.mxu0 %v217
        %684 = vmatpush.msra.mxu0 %v216
        %685 = vmatpush.msra.mxu0 %v215
        %686 = vmatmul.f32.gmra.mxu0 %v668
        %v687 = vpop.f32.mrf.mxu0
        %v688 = vadd.f32 0.0, %v687
        %689 = vdwg.mxu0
        %v690 = vadd.f32 %v664, %v688
        %v691 = vxor.u32 %v690, 2147483648
        %v692 = vmul.f32 %v691, 1.442695
        %v693 = vpow.pop %v692
        %v694 = vadd.f32 %v693, 1.0
        %v695 = vrcp.pop %v694
        %v696 = vmul.f32 %v694, %v695
        %v697 = vsub.f32 1.0, %v696
        %v698 = vmul.f32 %v695, %v697
        %v699 = vadd.f32 %v695, %v698
        %vm700 = vweird.f32 %v694
        %vm701 = vweird.f32 %v695
        %vm702 = vmor %vm700, %vm701
        %v703 = vsel %vm702, %v695, %v699
        %v704 = vand.u32 2147483647, %v694
        %vm705 = vcmp.eq.f32.partialorder %v704, 8.507059e+37
        %v706 = vand.u32 %v694, 2147483648
        %v707 = vor.u32 1.1754944e-38, %v706
        %v708 = vsel %vm705, %v707, %v703
        %v709 = vmul.f32 1.0, %v708
        %v710 = vtanh.pop %v690
        %v711 = vmul.f32 %v709, %v661
        %713 = vrot.lane.b32.xlu0 %v710, 32
        %v714 = vpop.permute.xlu0 %713
        %v716 = vmul.f32 %v709, %v714
        %718 = vrot.lane.b32.xlu0 %v716, 32
        %v719 = vpop.permute.xlu0 %718
        %v721 = vadd.f32 %v711, %v719
        %v722 = vtanh.pop %v721
        %724 = vrot.lane.b32.xlu0 %v722, 32
        %v725 = vpop.permute.xlu0 %724
        %v727 = vmul.f32 %v709, %v725
        %s728 = sadd.s32 %s293, 6
        %s729 = sld [smem:[#allocation5 + %s728]]
        %v730 = vstv %s729
        %vm731 = vcmp.lt.s32.totalorder %v223, %v730
        %v732 = vsel %vm731, %v727, %v660
        %v733 = vsel %vm731, %v721, %v661
        %v734 = vtanh.pop %v727
        %v735 = vsel %vm731, %v734, 0.0
        %v736 = vld [vmem:[%s179 + $0x38] sm:$0xff]
        %738 = vrot.lane.b32.xlu0 %v732, 64
        %v739 = vpop.permute.xlu0 %738
        %v740 = vsel %vm227, %v739, 0
        %742 = vmatpush.msra.mxu0 0.0
        %743 = vmatpush.msra.mxu0 0.0
        %744 = vmatpush.msra.mxu0 0.0
        %745 = vmatpush.msra.mxu0 0.0
        %746 = vmatpush.msra.mxu0 0.0
        %747 = vmatpush.msra.mxu0 0.0
        %748 = vmatpush.msra.mxu0 0.0
        %749 = vmatpush.msra.mxu0 0.0
        %750 = vmatpush.msra.mxu0 0.0
        %751 = vmatpush.msra.mxu0 0.0
        %752 = vmatpush.msra.mxu0 0.0
        %753 = vmatpush.msra.mxu0 0.0
        %754 = vmatpush.msra.mxu0 %v218
        %755 = vmatpush.msra.mxu0 %v217
        %756 = vmatpush.msra.mxu0 %v216
        %757 = vmatpush.msra.mxu0 %v215
        %758 = vmatmul.f32.gmra.mxu0 %v740
        %v759 = vpop.f32.mrf.mxu0
        %v760 = vadd.f32 0.0, %v759
        %761 = vdwg.mxu0
        %v762 = vadd.f32 %v736, %v760
        %v763 = vxor.u32 %v762, 2147483648
        %v764 = vmul.f32 %v763, 1.442695
        %v765 = vpow.pop %v764
        %v766 = vadd.f32 %v765, 1.0
        %v767 = vrcp.pop %v766
        %v768 = vmul.f32 %v766, %v767
        %v769 = vsub.f32 1.0, %v768
        %v770 = vmul.f32 %v767, %v769
        %v771 = vadd.f32 %v767, %v770
        %vm772 = vweird.f32 %v766
        %vm773 = vweird.f32 %v767
        %vm774 = vmor %vm772, %vm773
        %v775 = vsel %vm774, %v767, %v771
        %v776 = vand.u32 2147483647, %v766
        %vm777 = vcmp.eq.f32.partialorder %v776, 8.507059e+37
        %v778 = vand.u32 %v766, 2147483648
        %v779 = vor.u32 1.1754944e-38, %v778
        %v780 = vsel %vm777, %v779, %v775
        %v781 = vmul.f32 1.0, %v780
        %v782 = vtanh.pop %v762
        %v783 = vmul.f32 %v781, %v733
        %785 = vrot.lane.b32.xlu0 %v782, 32
        %v786 = vpop.permute.xlu0 %785
        %v788 = vmul.f32 %v781, %v786
        %790 = vrot.lane.b32.xlu0 %v788, 32
        %v791 = vpop.permute.xlu0 %790
        %v793 = vadd.f32 %v783, %v791
        %v794 = vtanh.pop %v793
        %796 = vrot.lane.b32.xlu0 %v794, 32
        %v797 = vpop.permute.xlu0 %796
        %v799 = vmul.f32 %v781, %v797
        %s800 = sadd.s32 %s293, 7
        %s801 = sld [smem:[#allocation5 + %s800]]
        %v802 = vstv %s801
        %vm803 = vcmp.lt.s32.totalorder %v223, %v802
        %v804 = vsel %vm803, %v799, %v732
        %v805 = vsel %vm803, %v793, %v733
        %v806 = vtanh.pop %v799
        %v807 = vsel %vm803, %v806, 0.0
        %809 = vrot.lane.b32.xlu0 %v303, 64
        %v810 = vpop.permute.xlu0 %809
        %813 = vrot.lane.b32.xlu0 %v375, 96
        %v814 = vpop.permute.xlu0 %813
        %817 = vrot.lane.b32.xlu0 %v519, 32
        %v818 = vpop.permute.xlu0 %817
        %821 = vrot.lane.b32.xlu0 %v591, 64
        %v822 = vpop.permute.xlu0 %821
        %825 = vrot.lane.b32.xlu0 %v663, 96
        %v826 = vpop.permute.xlu0 %825
        %829 = vrot.lane.b32.xlu0 %v807, 32
        %v830 = vpop.permute.xlu0 %829
        %v832 = vsel %vm227, %v810, %v814
        %vm833 = vcmask 523264
        %v834 = vsel %vm833, %v832, %v447
        %vm835 = vcmask 785408
        %v836 = vsel %vm835, %v834, %v818
        %v837 = vsel %vm227, %v822, %v826
        %v838 = vsel %vm833, %v837, %v735
        %v839 = vsel %vm835, %v838, %v830
        %840 = vst [vmem:[%s205] sm:$0xff] %v836
        %841 = vst [vmem:[%s205 + $0x8] sm:$0xff] %v839
        %843 = vrot.lane.b32.xlu0 %v804, 64
        %v844 = vpop.permute.xlu0 %843
        %846 = vst.msk [vmem:[#allocation2] sm:$0xff] %vm227, %v844
        %848 = vrot.lane.b32.xlu0 %v805, 96
        %v849 = vpop.permute.xlu0 %848
        %851 = vst.msk [vmem:[#allocation3] sm:$0xff] %vm227, %v849
        %s852 = sand.u32 %s100, 1
        %s853 = scalar_lea.sflag [#allocation8], %s852
        %s854 = sand.u32 %s100, 1
        %s855 = smul.addr %s854, 16
        %s856 = scalar_lea.vmem [#allocation11], %s855
        // Predicated region
        $region41: #{tpu_custom_call.1} parent=27 // pred_check
          %p857 = pneg %p110
        $region42: #{tpu_custom_call.1} parent=27 // pred_check_branch
          %859 = sbr.rel (%p857) target = $region44
        $region43: #{tpu_custom_call.1} parent=27 // pred_region
          %s860 = smul.u32 2, %s34
          %862 = vsyncadd %s853, 0
          %s863 = smul.addr %s33, 4
          %s864 = sadd.s32 %s860, %s863
          %s865 = smul.addr %s864, 8
          %s866 = scalar_lea.hbm %s3, %s865
          %s868 = sshll.u32 %s856, 4
          %s869 = int_to_ptr.vmem [resolvable:$true] %s868
          %s870 = sshll.u32 %s866, 4
          %s871 = int_to_ptr.hbm [resolvable:$true] %s870
          %873 = dma.vmem_to_hbm [thread:$0]  %s869, 256, %s871, %s853
        $region44: #{tpu_custom_call.1} parent=27 // pred_fallthru
          _
      $region28: #{tpu_custom_call.1} parent=5 // pred_fallthru
        _
      %p874 = scmp.le.s32.totalorder 2, %s24
      // Predicated region
      $region45: #{tpu_custom_call.1} parent=5 // pred_check
        %p875 = pneg %p874
      $region46: #{tpu_custom_call.1} parent=5 // pred_check_branch
        %877 = sbr.rel (%p875) target = $region48
      $region47: #{tpu_custom_call.1} parent=5 // pred_region
        %s878 = ssub.s32 %s24, 2
        // Predicated region
        $region49: #{tpu_custom_call.1} parent=47 // pred_check
          %p879 = pneg %p116
        $region50: #{tpu_custom_call.1} parent=47 // pred_check_branch
          %881 = sbr.rel (%p879) target = $region52
        $region51: #{tpu_custom_call.1} parent=47 // pred_region
          %s882 = sand.u32 %s101, 1
          %s883 = scalar_lea.sflag [#allocation8], %s882
          %s884 = sand.u32 %s101, 1
          %s885 = smul.addr %s884, 16
          %s886 = scalar_lea.vmem [#allocation11], %s885
          %888 = dma.done %s883, 256
        $region52: #{tpu_custom_call.1} parent=47 // pred_fallthru
          _
      $region48: #{tpu_custom_call.1} parent=5 // pred_fallthru
        _
    $region6: #{tpu_custom_call.1} parent=1 // loop_footer
      %s28 = sadd.s32 1, %s24
    $region7: #{tpu_custom_call.1} parent=1 // loop_footer_branch
      %23 = sbr.rel target = $region3
    $region8: #{tpu_custom_call.1} parent=1 // loop_exit
      _
    %889 = vsyncpa [#allocation7], 1
    %s890 = scalar_lea.sflag [#allocation7], 1
    %891 = vsyncpa %s890, 1
    %892 = vsyncpa [#allocation10], 1
    %893 = vsyncpa [#allocation8], 1
    %s894 = scalar_lea.sflag [#allocation8], 1
    %895 = vsyncpa %s894, 1

</llo_original>
